<compile_context>
chip_gen: v5e
topology: v5e:2x2
jax: 0.10.0
libtpu: 0.0.40
codegen_flags: <defaults>
</compile_context>

<pallas_src>
import functools
import math

import jax
import jax.numpy as jnp
import numpy as np
from jax import lax
from jax.experimental import pallas as pl
from jax.experimental.pallas import tpu as pltpu

EPS = 1e-5          # nn.LayerNorm default
NEG_SLOPE = 0.01    # nn.LeakyReLU default
LANE = 128
VMEM_LIMIT = 48 * 1024 * 1024     # explicit scoped-VMEM limit; fits v5e/v6e/v7x
STREAM_BUDGET = 8 * 1024 * 1024   # budget for double-buffered streaming blocks per kernel


def _round_up(x, m):
    return (x + m - 1) // m * m


def _layernorm(x, gamma, beta):
    mean = jnp.mean(x, axis=-1, keepdims=True)
    var = jnp.mean((x - mean) ** 2, axis=-1, keepdims=True)
    return (x - mean) * lax.rsqrt(var + EPS) * gamma + beta


def _pick_tile(total, target, gran=8):
    """Largest tile <= target that divides `total` and is a multiple of `gran`.

    Falls back to `total` (single full block) when no such divisor exists; the caller's
    budget-derived `target` keeps this from silently blowing up VMEM at realistic shapes.
    """
    if total <= target:
        return total
    t = (min(target, total) // gran) * gran
    while t >= gran:
        if total % t == 0:
            return t
        t -= gran
    return total


# ---------------- Kernel 1: LN(qp) -> Linear -> LeakyReLU -> gi = act @ W_ih + b_ih ----------------
def proj_gi_kernel(x_ref, g_ref, b_ref, wp_ref, bp_ref, wih_ref, bih_ref, gi_ref):
    x = x_ref[...]
    xn = _layernorm(x, g_ref[...], b_ref[...])                       # f32
    # bf16 MXU operands, f32 accumulation.
    y = jnp.dot(xn.astype(jnp.bfloat16), wp_ref[...],
                preferred_element_type=jnp.float32) + bp_ref[...]
    y = jnp.where(y > 0, y, NEG_SLOPE * y)                           # LeakyReLU (f32)
    # GRU input-side gate transform hoisted out of the recurrent loop (one large matmul).
    gi = jnp.dot(y.astype(jnp.bfloat16), wih_ref[...],
                 preferred_element_type=jnp.float32) + bih_ref[...]
    gi_ref[...] = gi.astype(jnp.bfloat16)                            # bf16, lane-dense store


# ---------------- Kernel 2: GRU recurrence (TB steps / grid step) + fused attention tail ----------------
def gru_attn_kernel(gi_ref, whh_ref, bhn_ref,
                    fund_ref, g2_ref, b2_ref, wqk_ref, bqk_ref,
                    wv_ref, bv_ref, o_ref, h_scr, *, inv_sqrt_h):
    tb = pl.program_id(0)

    @pl.when(tb == 0)
    def _():
        h_scr[...] = jnp.zeros_like(h_scr)

    whh = whh_ref[...]                               # (Hp, 3Hp) bf16, loaded once per grid step
    N, Hp = h_scr.shape
    TB = gi_ref.shape[0]
    # n-gate hidden bias broadcast hoisted out of the unrolled loop
    # (r/z hidden biases were folded into b_ih wrapper-side).
    bhn = pl.broadcast_to(bhn_ref[...], (N, Hp))

    def step(i, h):
        gi = gi_ref[i]                                               # (N, 3Hp) bf16, precomputed
        gh = jnp.dot(h.astype(jnp.bfloat16), whh,
                     preferred_element_type=jnp.float32)             # (N, 3Hp) f32
        r = jax.nn.sigmoid(gi[:, 0 * Hp:1 * Hp] + gh[:, 0 * Hp:1 * Hp])
        z = jax.nn.sigmoid(gi[:, 1 * Hp:2 * Hp] + gh[:, 1 * Hp:2 * Hp])
        n = jnp.tanh(gi[:, 2 * Hp:3 * Hp] + r * (gh[:, 2 * Hp:3 * Hp] + bhn))
        return (1.0 - z) * n + z * h

    # Hidden state carried in vregs over the unrolled block; one scratch store per grid step.
    h = lax.fori_loop(0, TB, step, h_scr[...], unroll=True)
    h_scr[...] = h

    @pl.when(tb == pl.num_programs(0) - 1)
    def _():
        # fundamental branch: LayerNorm + fused q|k projection (single MXU push)
        xf = fund_ref[...]
        xn = _layernorm(xf, g2_ref[...], b2_ref[...])
        qk_proj = jnp.dot(xn.astype(jnp.bfloat16), wqk_ref[...],
                          preferred_element_type=jnp.float32) + bqk_ref[...]
        q = qk_proj[:, :Hp]
        k = qk_proj[:, Hp:]
        v = jnp.dot(h.astype(jnp.bfloat16), wv_ref[...],
                    preferred_element_type=jnp.float32) + bv_ref[...]
        # scores: contract last axes of q and k (no explicit transpose of k)
        s = lax.dot_general(q.astype(jnp.bfloat16), k.astype(jnp.bfloat16),
                            (((1,), (1,)), ((), ())),
                            preferred_element_type=jnp.float32) * inv_sqrt_h
        m = jnp.max(s, axis=-1, keepdims=True)
        e = jnp.exp(s - m)
        w = e * pl.reciprocal(jnp.sum(e, axis=-1, keepdims=True), approx=True)
        o_ref[...] = jnp.dot(w.astype(jnp.bfloat16), v.astype(jnp.bfloat16),
                             preferred_element_type=jnp.float32) + v


# ---------------- wrapper ----------------
def attn_feature_extractor(params, fundamental_features, quantity_price_features):
    N, Ff = fundamental_features.shape
    T, N2, Fq = quantity_price_features.shape
    assert N == N2
    H = params["wq"].shape[1]
    Hp = _round_up(H, LANE)          # lane-aligned hidden dim
    TN = T * N
    f32, bf16 = jnp.float32, jnp.bfloat16

    def pad_cols(a, cols):
        return jnp.pad(a, ((0, 0), (0, cols - a.shape[1])))

    def pad_rows(a, rows):
        return jnp.pad(a, ((0, rows - a.shape[0]), (0, 0)))

    def pad_gates(a):
        # (in, 3H) -> (in, 3Hp): pad each gate's columns independently so slices stay lane-aligned.
        return jnp.concatenate(
            [pad_cols(a[:, g * H:(g + 1) * H], Hp) for g in range(3)], axis=1)

    # ---- parameter prep (once, wrapper-side): pad to Hp, fold r/z hidden biases, cast weights bf16 ----
    wp = pad_cols(params["wp"], Hp).astype(bf16)                       # (Fq, Hp)
    bp = pad_cols(params["bp"], Hp)                                    # (1, Hp)  f32
    b_ih_fold = params["b_ih"].at[:, :2 * H].add(params["b_hh"][:, :2 * H])   # fold r/z only
    w_ih = pad_rows(pad_gates(params["w_ih"]), Hp).astype(bf16)        # (Hp, 3Hp)
    b_ih = pad_gates(b_ih_fold)                                        # (1, 3Hp) f32
    w_hh = pad_rows(pad_gates(params["w_hh"]), Hp).astype(bf16)        # (Hp, 3Hp)
    b_hn = pad_cols(params["b_hh"][:, 2 * H:], Hp)                     # (1, Hp)  f32 (n-gate stays in loop)
    wqk = jnp.concatenate([pad_cols(params["wq"], Hp),
                           pad_cols(params["wk"], Hp)], axis=1).astype(bf16)   # (Ff, 2Hp)
    bqk = jnp.concatenate([pad_cols(params["bq"], Hp),
                           pad_cols(params["bk"], Hp)], axis=1)        # (1, 2Hp) f32
    wv = pad_rows(pad_cols(params["wv"], Hp), Hp).astype(bf16)         # (Hp, Hp)
    bv = pad_cols(params["bv"], Hp)                                    # (1, Hp)  f32

    # ---- kernel 1: row-tiled LN + proj + LeakyReLU + GRU input transform (gi, bf16) ----
    row_bytes = Fq * 4 + 3 * Hp * 2                                    # streamed in + out per row
    tm_target = max(256, STREAM_BUDGET // (2 * row_bytes))             # double-buffered budget
    TM = _pick_tile(TN, tm_target, gran=16)                            # 16: bf16 sublane packing
    qp2d = quantity_price_features.reshape(TN, Fq)
    gi = pl.pallas_call(
        proj_gi_kernel,
        out_shape=jax.ShapeDtypeStruct((TN, 3 * Hp), bf16),
        grid_spec=pltpu.PrefetchScalarGridSpec(
            num_scalar_prefetch=0,
            grid=(TN // TM,),
            in_specs=[
                pl.BlockSpec((TM, Fq), lambda i: (i, 0)),
                pl.BlockSpec((1, Fq), lambda i: (0, 0)),
                pl.BlockSpec((1, Fq), lambda i: (0, 0)),
                pl.BlockSpec((Fq, Hp), lambda i: (0, 0)),
                pl.BlockSpec((1, Hp), lambda i: (0, 0)),
                pl.BlockSpec((Hp, 3 * Hp), lambda i: (0, 0)),
                pl.BlockSpec((1, 3 * Hp), lambda i: (0, 0)),
            ],
            out_specs=pl.BlockSpec((TM, 3 * Hp), lambda i: (i, 0)),
        ),
        compiler_params=pltpu.CompilerParams(
            dimension_semantics=("parallel",),
            vmem_limit_bytes=VMEM_LIMIT),
    )(qp2d, params["ln1_g"], params["ln1_b"], wp, bp, w_ih, b_ih)
    gi3d = gi.reshape(T, N, 3 * Hp)

    # ---- kernel 2: GRU recurrence + fused fund-LN / q,k / attention tail ----
    step_bytes = N * 3 * Hp * 2
    tb_target = max(1, min(32, STREAM_BUDGET // (2 * step_bytes)))     # cap unroll depth
    TB = _pick_tile(T, tb_target, gran=1)                              # TB == T for short sequences
    out_p = pl.pallas_call(
        functools.partial(gru_attn_kernel, inv_sqrt_h=1.0 / math.sqrt(H)),
        out_shape=jax.ShapeDtypeStruct((N, Hp), f32),
        grid_spec=pltpu.PrefetchScalarGridSpec(
            num_scalar_prefetch=0,
            grid=(T // TB,),
            in_specs=[
                pl.BlockSpec((TB, N, 3 * Hp), lambda t: (t, 0, 0)),
                pl.BlockSpec((Hp, 3 * Hp), lambda t: (0, 0)),
                pl.BlockSpec((1, Hp), lambda t: (0, 0)),
                pl.BlockSpec((N, Ff), lambda t: (0, 0)),
                pl.BlockSpec((1, Ff), lambda t: (0, 0)),
                pl.BlockSpec((1, Ff), lambda t: (0, 0)),
                pl.BlockSpec((Ff, 2 * Hp), lambda t: (0, 0)),
                pl.BlockSpec((1, 2 * Hp), lambda t: (0, 0)),
                pl.BlockSpec((Hp, Hp), lambda t: (0, 0)),
                pl.BlockSpec((1, Hp), lambda t: (0, 0)),
            ],
            out_specs=pl.BlockSpec((N, Hp), lambda t: (0, 0)),
            scratch_shapes=[pltpu.VMEM((N, Hp), f32)],
        ),
        compiler_params=pltpu.CompilerParams(
            dimension_semantics=("arbitrary",),
            vmem_limit_bytes=VMEM_LIMIT),
    )(gi3d, w_hh, b_hn, fundamental_features, params["ln2_g"], params["ln2_b"],
      wqk, bqk, wv, bv)
    return out_p[:, :H]    # drop padded hidden lanes (exactly zero by construction)


# ---------------- pure-JAX reference (for correctness check) ----------------
def reference(params, fund, qp):
    def ln(x, g, b):
        m = jnp.mean(x, -1, keepdims=True)
        v = jnp.mean((x - m) ** 2, -1, keepdims=True)
        return (x - m) / jnp.sqrt(v + EPS) * g + b

    H = params["wq"].shape[1]
    fn = ln(fund, params["ln2_g"], params["ln2_b"])
    q = fn @ params["wq"] + params["bq"]
    k = fn @ params["wk"] + params["bk"]
    x = ln(qp, params["ln1_g"], params["ln1_b"]) @ params["wp"] + params["bp"]
    x = jnp.where(x > 0, x, NEG_SLOPE * x)

    def step(h, xt):
        gi = xt @ params["w_ih"] + params["b_ih"]
        gh = h @ params["w_hh"] + params["b_hh"]
        r = jax.nn.sigmoid(gi[:, :H] + gh[:, :H])
        z = jax.nn.sigmoid(gi[:, H:2 * H] + gh[:, H:2 * H])
        n = jnp.tanh(gi[:, 2 * H:] + r * gh[:, 2 * H:])
        return (1 - z) * n + z * h, None

    h0 = jnp.zeros((qp.shape[1], H), jnp.float32)
    h_last, _ = jax.lax.scan(step, h0, x)
    v = h_last @ params["wv"] + params["bv"]
    qk = (q @ k.T) / math.sqrt(H)
    w = jax.nn.softmax(qk, axis=-1)
    return w @ v + v


def make_params(key, f_fund, f_qp, hidden):
    ks = jax.random.split(key, 12)

    def w(k, shape, scale=0.1):
        return jax.random.normal(k, shape, jnp.float32) * scale

    return {
        "ln1_g": jnp.ones((1, f_qp), jnp.float32),
        "ln1_b": jnp.zeros((1, f_qp), jnp.float32),
        "ln2_g": jnp.ones((1, f_fund), jnp.float32),
        "ln2_b": jnp.zeros((1, f_fund), jnp.float32),
        "wp": w(ks[0], (f_qp, hidden)),
        "bp": w(ks[1], (1, hidden), 0.01),
        "w_ih": w(ks[2], (hidden, 3 * hidden)),   # GRU input weights, gate order [r, z, n]
        "w_hh": w(ks[3], (hidden, 3 * hidden)),
        "b_ih": w(ks[4], (1, 3 * hidden), 0.01),
        "b_hh": w(ks[5], (1, 3 * hidden), 0.01),
        "wq": w(ks[6], (f_fund, hidden)),
        "bq": w(ks[7], (1, hidden), 0.01),
        "wk": w(ks[8], (f_fund, hidden)),
        "bk": w(ks[9], (1, hidden), 0.01),
        "wv": w(ks[10], (hidden, hidden)),
        "bv": w(ks[11], (1, hidden), 0.01),
    }


if __name__ == "__main__":
    N, T = 8, 8                     # num stocks (batch), sequence length
    F_FUND, F_QP, HIDDEN = 16, 24, 32

    key = jax.random.PRNGKey(0)
    k_p, k_f, k_q = jax.random.split(key, 3)
    params = make_params(k_p, F_FUND, F_QP, HIDDEN)
    fund = jax.random.normal(k_f, (N, F_FUND), jnp.float32)
    qp = jax.random.normal(k_q, (T, N, F_QP), jnp.float32)

    out = attn_feature_extractor(params, fund, qp)
    out = jax.block_until_ready(out)

    ref = jax.block_until_ready(reference(params, fund, qp))
    assert out.shape == (N, HIDDEN)
    # bf16-fed MXU + approx reciprocal introduce ~1e-3-level deviations vs the pure-f32 reference.
    np.testing.assert_allclose(np.asarray(out), np.asarray(ref), rtol=1e-2, atol=1e-2)

    print("KERNEL_OK")
</pallas_src>

<mosaic_0001>
module attributes {stable_mosaic.version = 11 : i64} {
  func.func @proj_gi_kernel(%arg0: i32, %arg1: memref<64x24xf32, #tpu.memory_space<vmem>>, %arg2: memref<1x24xf32, #tpu.memory_space<vmem>>, %arg3: memref<1x24xf32, #tpu.memory_space<vmem>>, %arg4: memref<24x128xbf16, #tpu.memory_space<vmem>>, %arg5: memref<1x128xf32, #tpu.memory_space<vmem>>, %arg6: memref<128x384xbf16, #tpu.memory_space<vmem>>, %arg7: memref<1x384xf32, #tpu.memory_space<vmem>>, %arg8: memref<64x384xbf16, #tpu.memory_space<vmem>>) attributes {dimension_semantics = [#tpu.dimension_semantics<parallel>], iteration_bounds = array<i64: 1>, scalar_prefetch = 0 : i64, scratch_operands = 0 : i64, tpu.core_type = #tpu.core_type<tc>, window_params = [{transform_indices = @transform_0, window_bounds = array<i64: 64, 24>}, {pipeline_mode = #tpu.pipeline_mode<synchronous>, transform_indices = @transform_1, window_bounds = array<i64: 1, 24>}, {pipeline_mode = #tpu.pipeline_mode<synchronous>, transform_indices = @transform_2, window_bounds = array<i64: 1, 24>}, {pipeline_mode = #tpu.pipeline_mode<synchronous>, transform_indices = @transform_3, window_bounds = array<i64: 24, 128>}, {pipeline_mode = #tpu.pipeline_mode<synchronous>, transform_indices = @transform_4, window_bounds = array<i64: 1, 128>}, {pipeline_mode = #tpu.pipeline_mode<synchronous>, transform_indices = @transform_5, window_bounds = array<i64: 128, 384>}, {pipeline_mode = #tpu.pipeline_mode<synchronous>, transform_indices = @transform_6, window_bounds = array<i64: 1, 384>}, {transform_indices = @transform_7, window_bounds = array<i64: 64, 384>}]} {
    %c0 = arith.constant 0 : index
    %c0_0 = arith.constant 0 : index
    %0 = vector.load %arg1[%c0, %c0_0] : memref<64x24xf32, #tpu.memory_space<vmem>>, vector<64x24xf32>
    %c0_1 = arith.constant 0 : index
    %c0_2 = arith.constant 0 : index
    %1 = vector.load %arg2[%c0_1, %c0_2] : memref<1x24xf32, #tpu.memory_space<vmem>>, vector<1x24xf32>
    %c0_3 = arith.constant 0 : index
    %c0_4 = arith.constant 0 : index
    %2 = vector.load %arg3[%c0_3, %c0_4] : memref<1x24xf32, #tpu.memory_space<vmem>>, vector<1x24xf32>
    %cst = arith.constant dense<0.000000e+00> : vector<64xf32>
    %3 = vector.multi_reduction <add>, %0, %cst [1] : vector<64x24xf32> to vector<64xf32>
    %4 = vector.shape_cast %3 : vector<64xf32> to vector<64x1xf32>
    %cst_5 = arith.constant 2.400000e+01 : f32
    %5 = vector.broadcast %cst_5 : f32 to vector<64x1xf32>
    %6 = arith.divf %4, %5 : vector<64x1xf32>
    %7 = vector.broadcast %6 : vector<64x1xf32> to vector<64x24xf32>
    %8 = arith.subf %0, %7 : vector<64x24xf32>
    %9 = arith.mulf %8, %8 : vector<64x24xf32>
    %cst_6 = arith.constant dense<0.000000e+00> : vector<64xf32>
    %10 = vector.multi_reduction <add>, %9, %cst_6 [1] : vector<64x24xf32> to vector<64xf32>
    %11 = vector.shape_cast %10 : vector<64xf32> to vector<64x1xf32>
    %cst_7 = arith.constant 2.400000e+01 : f32
    %12 = vector.broadcast %cst_7 : f32 to vector<64x1xf32>
    %13 = arith.divf %11, %12 : vector<64x1xf32>
    %14 = vector.broadcast %6 : vector<64x1xf32> to vector<64x24xf32>
    %15 = arith.subf %0, %14 : vector<64x24xf32>
    %cst_8 = arith.constant 9.99999974E-6 : f32
    %16 = vector.broadcast %cst_8 : f32 to vector<64x1xf32>
    %17 = arith.addf %13, %16 : vector<64x1xf32>
    %18 = math.rsqrt %17 : vector<64x1xf32>
    %19 = vector.broadcast %18 : vector<64x1xf32> to vector<64x24xf32>
    %20 = arith.mulf %15, %19 : vector<64x24xf32>
    %21 = vector.broadcast %1 : vector<1x24xf32> to vector<64x24xf32>
    %22 = arith.mulf %20, %21 : vector<64x24xf32>
    %23 = vector.broadcast %2 : vector<1x24xf32> to vector<64x24xf32>
    %24 = arith.addf %22, %23 : vector<64x24xf32>
    %25 = arith.truncf %24 : vector<64x24xf32> to vector<64x24xbf16>
    %c0_9 = arith.constant 0 : index
    %c0_10 = arith.constant 0 : index
    %26 = vector.load %arg4[%c0_9, %c0_10] : memref<24x128xbf16, #tpu.memory_space<vmem>>, vector<24x128xbf16>
    %cst_11 = arith.constant dense<0.000000e+00> : vector<64x128xf32>
    %27 = tpu.matmul %25, %26, %cst_11 {dimension_numbers = #tpu.dot_dimension_numbers<[1], [0], [0], [1], [0, 0, 1, 1], [], []>} : vector<64x24xbf16>, vector<24x128xbf16>, vector<64x128xf32> -> vector<64x128xf32>
    %c0_12 = arith.constant 0 : index
    %c0_13 = arith.constant 0 : index
    %28 = vector.load %arg5[%c0_12, %c0_13] : memref<1x128xf32, #tpu.memory_space<vmem>>, vector<1x128xf32>
    %29 = vector.broadcast %28 : vector<1x128xf32> to vector<64x128xf32>
    %30 = arith.addf %27, %29 : vector<64x128xf32>
    %cst_14 = arith.constant 0.000000e+00 : f32
    %31 = vector.broadcast %cst_14 : f32 to vector<64x128xf32>
    %32 = arith.cmpf ogt, %30, %31 : vector<64x128xf32>
    %cst_15 = arith.constant 0.00999999977 : f32
    %33 = vector.broadcast %cst_15 : f32 to vector<64x128xf32>
    %34 = arith.mulf %33, %30 : vector<64x128xf32>
    %35 = arith.select %32, %30, %34 : vector<64x128xi1>, vector<64x128xf32>
    %36 = arith.truncf %35 : vector<64x128xf32> to vector<64x128xbf16>
    %c0_16 = arith.constant 0 : index
    %c0_17 = arith.constant 0 : index
    %37 = vector.load %arg6[%c0_16, %c0_17] : memref<128x384xbf16, #tpu.memory_space<vmem>>, vector<128x384xbf16>
    %cst_18 = arith.constant dense<0.000000e+00> : vector<64x384xf32>
    %38 = tpu.matmul %36, %37, %cst_18 {dimension_numbers = #tpu.dot_dimension_numbers<[1], [0], [0], [1], [0, 0, 1, 1], [], []>} : vector<64x128xbf16>, vector<128x384xbf16>, vector<64x384xf32> -> vector<64x384xf32>
    %c0_19 = arith.constant 0 : index
    %c0_20 = arith.constant 0 : index
    %39 = vector.load %arg7[%c0_19, %c0_20] : memref<1x384xf32, #tpu.memory_space<vmem>>, vector<1x384xf32>
    %40 = vector.broadcast %39 : vector<1x384xf32> to vector<64x384xf32>
    %41 = arith.addf %38, %40 : vector<64x384xf32>
    %42 = arith.truncf %41 : vector<64x384xf32> to vector<64x384xbf16>
    %c0_21 = arith.constant 0 : index
    %c0_22 = arith.constant 0 : index
    %43 = vector.load %arg8[%c0_21, %c0_22] : memref<64x384xbf16, #tpu.memory_space<vmem>>, vector<64x384xbf16>
    tpu.vector_store %arg8[%c0_21, %c0_22], %42 {strides = array<i32>} : memref<64x384xbf16, #tpu.memory_space<vmem>>, vector<64x384xbf16>,
    return
  }
  func.func @transform_0(%arg0: i32) -> (i32, i32) {
    %c0_i32 = arith.constant 0 : i32
    %c0_i32_0 = arith.constant 0 : i32
    return %arg0, %c0_i32 : i32, i32
  }
  func.func @transform_1(%arg0: i32) -> (i32, i32) {
    %c0_i32 = arith.constant 0 : i32
    %c0_i32_0 = arith.constant 0 : i32
    %c0_i32_1 = arith.constant 0 : i32
    return %c0_i32, %c0_i32_0 : i32, i32
  }
  func.func @transform_2(%arg0: i32) -> (i32, i32) {
    %c0_i32 = arith.constant 0 : i32
    %c0_i32_0 = arith.constant 0 : i32
    %c0_i32_1 = arith.constant 0 : i32
    return %c0_i32, %c0_i32_0 : i32, i32
  }
  func.func @transform_3(%arg0: i32) -> (i32, i32) {
    %c0_i32 = arith.constant 0 : i32
    %c0_i32_0 = arith.constant 0 : i32
    %c0_i32_1 = arith.constant 0 : i32
    return %c0_i32, %c0_i32_0 : i32, i32
  }
  func.func @transform_4(%arg0: i32) -> (i32, i32) {
    %c0_i32 = arith.constant 0 : i32
    %c0_i32_0 = arith.constant 0 : i32
    %c0_i32_1 = arith.constant 0 : i32
    return %c0_i32, %c0_i32_0 : i32, i32
  }
  func.func @transform_5(%arg0: i32) -> (i32, i32) {
    %c0_i32 = arith.constant 0 : i32
    %c0_i32_0 = arith.constant 0 : i32
    %c0_i32_1 = arith.constant 0 : i32
    return %c0_i32, %c0_i32_0 : i32, i32
  }
  func.func @transform_6(%arg0: i32) -> (i32, i32) {
    %c0_i32 = arith.constant 0 : i32
    %c0_i32_0 = arith.constant 0 : i32
    %c0_i32_1 = arith.constant 0 : i32
    return %c0_i32, %c0_i32_0 : i32, i32
  }
  func.func @transform_7(%arg0: i32) -> (i32, i32) {
    %c0_i32 = arith.constant 0 : i32
    %c0_i32_0 = arith.constant 0 : i32
    return %arg0, %c0_i32 : i32, i32
  }
}

</mosaic_0001>

<llo_original>
// kernel: tpu_custom_call.1
$region0: #{tpu_custom_call.1}
  #allocation0 [shape = 'u32[]', space=smem, size = 0x4, offset = 0x4, fixed_abs, tag = 'smem constant byte address 0x4 - core index']
  #allocation1 [shape = 'u32[72,128]{1,0:T(1,128)}', space=vmem, size = 0x9000, scoped, tag = 'internal scratch']
  %s0 = inlined_call_operand.vmem [shape: f32[64,24], index: 0, kind: input, shape index: {}]
  %s1 = inlined_call_operand.vmem [shape: f32[1,24], index: 1, kind: input, shape index: {}]
  %s2 = inlined_call_operand.vmem [shape: f32[1,24], index: 2, kind: input, shape index: {}]
  %s3 = inlined_call_operand.vmem [shape: bf16[24,128], index: 3, kind: input, shape index: {}]
  %s4 = inlined_call_operand.vmem [shape: f32[1,128], index: 4, kind: input, shape index: {}]
  %s5 = inlined_call_operand.hbm [shape: bf16[128,384], index: 5, kind: input, shape index: {}]
  %s6 = inlined_call_operand.vmem [shape: f32[1,384], index: 6, kind: input, shape index: {}]
  %s7 = inlined_call_operand.hbm [shape: bf16[64,384], index: 7, kind: output, shape index: {}]
  %s8 = sld [smem:[#allocation0]]
  $region42: #{tpu_custom_call.1} parent=0
    _
  %s10 = ssub.s32 1, %s8
  %s11 = scalar_select 0, %s10, %s8
  $region1: #{tpu_custom_call.1} parent=0
    #allocation2 [shape = 'u8[98304]{0}', space=vmem, size = 0x18000, scoped, tag = 'input window, operand 5, single buffered']
    #allocation3 [shape = 's32[1]{0}', space=sflag, size = 0x4, scoped, tag = 'scoped memory for tpu_custom_call.1']
    #allocation4 [shape = 's32[1]{0}', space=sflag, size = 0x4, scoped, tag = 'scoped memory for tpu_custom_call.1']
    #allocation5 [shape = 'u8[49152]{0}', space=vmem, size = 0xc000, scoped, tag = 'output window, operand 0, single buffered']
    %12 = vsyncpa [#allocation3], 0
    %13 = vsyncpa [#allocation4], 0
    // Predicated region
    $region2: #{tpu_custom_call.1} parent=1 // pred_check
      _
    $region3: #{tpu_custom_call.1} parent=1 // pred_check_branch
      %15 = sbr.rel (0) target = $region5
    $region4: #{tpu_custom_call.1} parent=1 // pred_region
      _
    $region5: #{tpu_custom_call.1} parent=1 // pred_fallthru
      _
    // Predicated region
    $region6: #{tpu_custom_call.1} parent=1 // pred_check
      _
    $region7: #{tpu_custom_call.1} parent=1 // pred_check_branch
      %17 = sbr.rel (0) target = $region9
    $region8: #{tpu_custom_call.1} parent=1 // pred_region
      _
    $region9: #{tpu_custom_call.1} parent=1 // pred_fallthru
      _
    // Predicated region
    $region10: #{tpu_custom_call.1} parent=1 // pred_check
      _
    $region11: #{tpu_custom_call.1} parent=1 // pred_check_branch
      %19 = sbr.rel (0) target = $region13
    $region12: #{tpu_custom_call.1} parent=1 // pred_region
      _
    $region13: #{tpu_custom_call.1} parent=1 // pred_fallthru
      _
    // Predicated region
    $region14: #{tpu_custom_call.1} parent=1 // pred_check
      _
    $region15: #{tpu_custom_call.1} parent=1 // pred_check_branch
      %21 = sbr.rel (0) target = $region17
    $region16: #{tpu_custom_call.1} parent=1 // pred_region
      _
    $region17: #{tpu_custom_call.1} parent=1 // pred_fallthru
      _
    // Predicated region
    $region18: #{tpu_custom_call.1} parent=1 // pred_check
      _
    $region19: #{tpu_custom_call.1} parent=1 // pred_check_branch
      %23 = sbr.rel (0) target = $region21
    $region20: #{tpu_custom_call.1} parent=1 // pred_region
      _
    $region21: #{tpu_custom_call.1} parent=1 // pred_fallthru
      _
    // Predicated region
    $region22: #{tpu_custom_call.1} parent=1 // pred_check
      _
    $region23: #{tpu_custom_call.1} parent=1 // pred_check_branch
      %25 = sbr.rel (0) target = $region25
    $region24: #{tpu_custom_call.1} parent=1 // pred_region
      %27 = vsyncadd [#allocation3], 0
      %s28 = sshll.u32 %s5, 4
      %s29 = int_to_ptr.hbm [resolvable:$true] %s28
      %s30 = sshll.u32 [#allocation2], 4
      %s31 = int_to_ptr.vmem [resolvable:$true] %s30
      %36 = dma.hbm_to_vmem [thread:$0]  %s29, 3072, %s31, [#allocation3], 192, 192, 12
    $region25: #{tpu_custom_call.1} parent=1 // pred_fallthru
      _
    // Predicated region
    $region26: #{tpu_custom_call.1} parent=1 // pred_check
      _
    $region27: #{tpu_custom_call.1} parent=1 // pred_check_branch
      %38 = sbr.rel (0) target = $region29
    $region28: #{tpu_custom_call.1} parent=1 // pred_region
      _
    $region29: #{tpu_custom_call.1} parent=1 // pred_fallthru
      _
    // Predicated region
    $region30: #{tpu_custom_call.1} parent=1 // pred_check
      _
    $region31: #{tpu_custom_call.1} parent=1 // pred_check_branch
      %40 = sbr.rel (0) target = $region33
    $region32: #{tpu_custom_call.1} parent=1 // pred_region
      %42 = dma.done [#allocation3], 3072
    $region33: #{tpu_custom_call.1} parent=1 // pred_fallthru
      _
    %v44 = vld [vmem:[%s0] sm:$0xff]
    %v45 = vld [vmem:[%s0 + $0x8] sm:$0xff]
    %v46 = vld [vmem:[%s0 + $0x10] sm:$0xff]
    %v47 = vld [vmem:[%s0 + $0x18] sm:$0xff]
    %v48 = vld [vmem:[%s0 + $0x20] sm:$0xff]
    %v49 = vld [vmem:[%s0 + $0x28] sm:$0xff]
    %v50 = vld [vmem:[%s0 + $0x30] sm:$0xff]
    %v51 = vld [vmem:[%s0 + $0x38] sm:$0xff]
    %v52 = vld [vmem:[%s1] sm:$0x1]
    %v53 = vld [vmem:[%s2] sm:$0x1]
    %vm54 = vcmask 195584
    %v55 = vsel %vm54, %v44, 0.0
    %56 = vadd.xlane.f32.xlu0 %v55
    %v57 = vpop.xlane.xlu0 %56
    %v58 = vsel %vm54, %v45, 0.0
    %59 = vadd.xlane.f32.xlu0 %v58
    %v60 = vpop.xlane.xlu0 %59
    %v61 = vsel %vm54, %v46, 0.0
    %62 = vadd.xlane.f32.xlu0 %v61
    %v63 = vpop.xlane.xlu0 %62
    %v64 = vsel %vm54, %v47, 0.0
    %65 = vadd.xlane.f32.xlu0 %v64
    %v66 = vpop.xlane.xlu0 %65
    %v67 = vsel %vm54, %v48, 0.0
    %68 = vadd.xlane.f32.xlu0 %v67
    %v69 = vpop.xlane.xlu0 %68
    %v70 = vsel %vm54, %v49, 0.0
    %71 = vadd.xlane.f32.xlu0 %v70
    %v72 = vpop.xlane.xlu0 %71
    %v73 = vsel %vm54, %v50, 0.0
    %74 = vadd.xlane.f32.xlu0 %v73
    %v75 = vpop.xlane.xlu0 %74
    %v76 = vsel %vm54, %v51, 0.0
    %77 = vadd.xlane.f32.xlu0 %v76
    %v78 = vpop.xlane.xlu0 %77
    %v79 = vrcp.pop 24.0
    %v80 = vmul.f32 24.0, %v79
    %v81 = vsub.f32 1.0, %v80
    %v82 = vmul.f32 %v79, %v81
    %v83 = vadd.f32 %v79, %v82
    %vm84 = vweird.f32 %v79
    %v85 = vsel %vm84, %v79, %v83
    %v86 = vmul.f32 %v57, %v85
    %v87 = vmul.f32 %v60, %v85
    %v88 = vmul.f32 %v63, %v85
    %v89 = vmul.f32 %v66, %v85
    %v90 = vmul.f32 %v69, %v85
    %v91 = vmul.f32 %v72, %v85
    %v92 = vmul.f32 %v75, %v85
    %v93 = vmul.f32 %v78, %v85
    %v94 = vsub.f32 %v44, %v86
    %v95 = vsub.f32 %v45, %v87
    %v96 = vsub.f32 %v46, %v88
    %v97 = vsub.f32 %v47, %v89
    %v98 = vsub.f32 %v48, %v90
    %v99 = vsub.f32 %v49, %v91
    %v100 = vsub.f32 %v50, %v92
    %v101 = vsub.f32 %v51, %v93
    %v102 = vmul.f32 %v94, %v94
    %v103 = vmul.f32 %v95, %v95
    %v104 = vmul.f32 %v96, %v96
    %v105 = vmul.f32 %v97, %v97
    %v106 = vmul.f32 %v98, %v98
    %v107 = vmul.f32 %v99, %v99
    %v108 = vmul.f32 %v100, %v100
    %v109 = vmul.f32 %v101, %v101
    %v110 = vsel %vm54, %v102, 0.0
    %111 = vadd.xlane.f32.xlu0 %v110
    %v112 = vpop.xlane.xlu0 %111
    %v113 = vsel %vm54, %v103, 0.0
    %114 = vadd.xlane.f32.xlu0 %v113
    %v115 = vpop.xlane.xlu0 %114
    %v116 = vsel %vm54, %v104, 0.0
    %117 = vadd.xlane.f32.xlu0 %v116
    %v118 = vpop.xlane.xlu0 %117
    %v119 = vsel %vm54, %v105, 0.0
    %120 = vadd.xlane.f32.xlu0 %v119
    %v121 = vpop.xlane.xlu0 %120
    %v122 = vsel %vm54, %v106, 0.0
    %123 = vadd.xlane.f32.xlu0 %v122
    %v124 = vpop.xlane.xlu0 %123
    %v125 = vsel %vm54, %v107, 0.0
    %126 = vadd.xlane.f32.xlu0 %v125
    %v127 = vpop.xlane.xlu0 %126
    %v128 = vsel %vm54, %v108, 0.0
    %129 = vadd.xlane.f32.xlu0 %v128
    %v130 = vpop.xlane.xlu0 %129
    %v131 = vsel %vm54, %v109, 0.0
    %132 = vadd.xlane.f32.xlu0 %v131
    %v133 = vpop.xlane.xlu0 %132
    %v134 = vmul.f32 %v112, %v85
    %v135 = vmul.f32 %v115, %v85
    %v136 = vmul.f32 %v118, %v85
    %v137 = vmul.f32 %v121, %v85
    %v138 = vmul.f32 %v124, %v85
    %v139 = vmul.f32 %v127, %v85
    %v140 = vmul.f32 %v130, %v85
    %v141 = vmul.f32 %v133, %v85
    %v142 = vadd.f32 %v134, 1e-05
    %v143 = vadd.f32 %v135, 1e-05
    %v144 = vadd.f32 %v136, 1e-05
    %v145 = vadd.f32 %v137, 1e-05
    %v146 = vadd.f32 %v138, 1e-05
    %v147 = vadd.f32 %v139, 1e-05
    %v148 = vadd.f32 %v140, 1e-05
    %v149 = vadd.f32 %v141, 1e-05
    %v150 = vrsqrt.pop %v142
    %v151 = vmul.f32 %v150, %v142
    %v152 = vmul.f32 %v151, %v150
    %v153 = vmul.f32 0.5, %v152
    %v154 = vsub.f32 1.5, %v153
    %v155 = vmul.f32 %v150, %v154
    %vm156 = vweird.f32 %v142
    %vm157 = vweird.f32 %v150
    %vm158 = vmor %vm156, %vm157
    %v159 = vsel %vm158, %v150, %v155
    %v160 = vrsqrt.pop %v143
    %v161 = vmul.f32 %v160, %v143
    %v162 = vmul.f32 %v161, %v160
    %v163 = vmul.f32 0.5, %v162
    %v164 = vsub.f32 1.5, %v163
    %v165 = vmul.f32 %v160, %v164
    %vm166 = vweird.f32 %v143
    %vm167 = vweird.f32 %v160
    %vm168 = vmor %vm166, %vm167
    %v169 = vsel %vm168, %v160, %v165
    %v170 = vrsqrt.pop %v144
    %v171 = vmul.f32 %v170, %v144
    %v172 = vmul.f32 %v171, %v170
    %v173 = vmul.f32 0.5, %v172
    %v174 = vsub.f32 1.5, %v173
    %v175 = vmul.f32 %v170, %v174
    %vm176 = vweird.f32 %v144
    %vm177 = vweird.f32 %v170
    %vm178 = vmor %vm176, %vm177
    %v179 = vsel %vm178, %v170, %v175
    %v180 = vrsqrt.pop %v145
    %v181 = vmul.f32 %v180, %v145
    %v182 = vmul.f32 %v181, %v180
    %v183 = vmul.f32 0.5, %v182
    %v184 = vsub.f32 1.5, %v183
    %v185 = vmul.f32 %v180, %v184
    %vm186 = vweird.f32 %v145
    %vm187 = vweird.f32 %v180
    %vm188 = vmor %vm186, %vm187
    %v189 = vsel %vm188, %v180, %v185
    %v190 = vrsqrt.pop %v146
    %v191 = vmul.f32 %v190, %v146
    %v192 = vmul.f32 %v191, %v190
    %v193 = vmul.f32 0.5, %v192
    %v194 = vsub.f32 1.5, %v193
    %v195 = vmul.f32 %v190, %v194
    %vm196 = vweird.f32 %v146
    %vm197 = vweird.f32 %v190
    %vm198 = vmor %vm196, %vm197
    %v199 = vsel %vm198, %v190, %v195
    %v200 = vrsqrt.pop %v147
    %v201 = vmul.f32 %v200, %v147
    %v202 = vmul.f32 %v201, %v200
    %v203 = vmul.f32 0.5, %v202
    %v204 = vsub.f32 1.5, %v203
    %v205 = vmul.f32 %v200, %v204
    %vm206 = vweird.f32 %v147
    %vm207 = vweird.f32 %v200
    %vm208 = vmor %vm206, %vm207
    %v209 = vsel %vm208, %v200, %v205
    %v210 = vrsqrt.pop %v148
    %v211 = vmul.f32 %v210, %v148
    %v212 = vmul.f32 %v211, %v210
    %v213 = vmul.f32 0.5, %v212
    %v214 = vsub.f32 1.5, %v213
    %v215 = vmul.f32 %v210, %v214
    %vm216 = vweird.f32 %v148
    %vm217 = vweird.f32 %v210
    %vm218 = vmor %vm216, %vm217
    %v219 = vsel %vm218, %v210, %v215
    %v220 = vrsqrt.pop %v149
    %v221 = vmul.f32 %v220, %v149
    %v222 = vmul.f32 %v221, %v220
    %v223 = vmul.f32 0.5, %v222
    %v224 = vsub.f32 1.5, %v223
    %v225 = vmul.f32 %v220, %v224
    %vm226 = vweird.f32 %v149
    %vm227 = vweird.f32 %v220
    %vm228 = vmor %vm226, %vm227
    %v229 = vsel %vm228, %v220, %v225
    %v230 = vmul.f32 %v94, %v159
    %v231 = vmul.f32 %v95, %v169
    %v232 = vmul.f32 %v96, %v179
    %v233 = vmul.f32 %v97, %v189
    %v234 = vmul.f32 %v98, %v199
    %v235 = vmul.f32 %v99, %v209
    %v236 = vmul.f32 %v100, %v219
    %v237 = vmul.f32 %v101, %v229
    %v239 = vperm.slane %v52, 0
    %v241 = vmul.f32 %v230, %v239
    %v242 = vmul.f32 %v231, %v239
    %v243 = vmul.f32 %v232, %v239
    %v244 = vmul.f32 %v233, %v239
    %v245 = vmul.f32 %v234, %v239
    %v246 = vmul.f32 %v235, %v239
    %v247 = vmul.f32 %v236, %v239
    %v248 = vmul.f32 %v237, %v239
    %v250 = vperm.slane %v53, 0
    %v252 = vadd.f32 %v241, %v250
    %v253 = vadd.f32 %v242, %v250
    %v254 = vadd.f32 %v243, %v250
    %v255 = vadd.f32 %v244, %v250
    %v256 = vadd.f32 %v245, %v250
    %v257 = vadd.f32 %v246, %v250
    %v258 = vadd.f32 %v247, %v250
    %v259 = vadd.f32 %v248, %v250
    %v260 = vpack.c.bf16 %v253, %v252
    %v261 = vpack.c.bf16 %v255, %v254
    %v262 = vpack.c.bf16 %v257, %v256
    %v263 = vpack.c.bf16 %v259, %v258
    %v264 = vld [vmem:[%s3] sm:$0xf]
    %v265 = vld [vmem:[%s3 + $0x4] sm:$0xf]
    %v266 = vld [vmem:[%s3 + $0x8] sm:$0xf]
    %v267 = vld [vmem:[%s4] sm:$0x1]
    %v269 = vperm.slane %v267, 0
    %v274 = vunpack.c.l.b16 %v264
    %v275 = vunpack.c.l.b16 %v265
    %v276 = vunpack.c.l.b16 %v266
    %v277 = vpack.c.b16 %v275, %v274
    %v278 = vpack.c.b16 %v276, %v276
    %v281 = vsel %vm54, %v260, 0
    %v284 = vsel %vm54, %v261, 0
    %v287 = vsel %vm54, %v262, 0
    %v290 = vsel %vm54, %v263, 0
    %vm292 = vcmask 1043456
    %v294 = vsel %vm292, %v278, 0
    %296 = vmatpush.bf16.msra.mxu0 0
    %297 = vmatpush.bf16.msra.mxu0 0
    %298 = vmatpush.bf16.msra.mxu0 0
    %299 = vmatpush.bf16.msra.mxu0 0
    %300 = vmatpush.bf16.msra.mxu0 0
    %301 = vmatpush.bf16.msra.mxu0 0
    %302 = vmatpush.bf16.msra.mxu0 %v294
    %303 = vmatpush.bf16.msra.mxu0 %v277
    %304 = vmatmul.bf16.gmra.mxu0 %v281
    %v305 = vpop.f32.mrf.mxu0
    %v306 = vadd.f32 %v269, %v305
    %v307 = vpop.f32.mrf.mxu0
    %v308 = vadd.f32 %v269, %v307
    %309 = vmatmul.bf16.gmra.mxu0 %v284
    %v310 = vpop.f32.mrf.mxu0
    %v311 = vadd.f32 %v269, %v310
    %v312 = vpop.f32.mrf.mxu0
    %v313 = vadd.f32 %v269, %v312
    %314 = vmatmul.bf16.gmra.mxu0 %v287
    %v315 = vpop.f32.mrf.mxu0
    %v316 = vadd.f32 %v269, %v315
    %v317 = vpop.f32.mrf.mxu0
    %v318 = vadd.f32 %v269, %v317
    %319 = vmatmul.bf16.gmra.mxu0 %v290
    %v320 = vpop.f32.mrf.mxu0
    %v321 = vadd.f32 %v269, %v320
    %v322 = vpop.f32.mrf.mxu0
    %v323 = vadd.f32 %v269, %v322
    %324 = vdwg.mxu0
    %vm325 = vcmp.gt.f32.partialorder %v306, 0.0
    %vm326 = vcmp.gt.f32.partialorder %v308, 0.0
    %vm327 = vcmp.gt.f32.partialorder %v311, 0.0
    %vm328 = vcmp.gt.f32.partialorder %v313, 0.0
    %vm329 = vcmp.gt.f32.partialorder %v316, 0.0
    %vm330 = vcmp.gt.f32.partialorder %v318, 0.0
    %vm331 = vcmp.gt.f32.partialorder %v321, 0.0
    %vm332 = vcmp.gt.f32.partialorder %v323, 0.0
    %v333 = vmul.f32 %v306, 0.01
    %v334 = vmul.f32 %v308, 0.01
    %v335 = vmul.f32 %v311, 0.01
    %v336 = vmul.f32 %v313, 0.01
    %v337 = vmul.f32 %v316, 0.01
    %v338 = vmul.f32 %v318, 0.01
    %v339 = vmul.f32 %v321, 0.01
    %v340 = vmul.f32 %v323, 0.01
    %v341 = vsel %vm325, %v306, %v333
    %v342 = vsel %vm326, %v308, %v334
    %v343 = vsel %vm327, %v311, %v335
    %v344 = vsel %vm328, %v313, %v336
    %v345 = vsel %vm329, %v316, %v337
    %v346 = vsel %vm330, %v318, %v338
    %v347 = vsel %vm331, %v321, %v339
    %v348 = vsel %vm332, %v323, %v340
    %v349 = vpack.c.bf16 %v342, %v341
    %v350 = vpack.c.bf16 %v344, %v343
    %v351 = vpack.c.bf16 %v346, %v345
    %v352 = vpack.c.bf16 %v348, %v347
    %v353 = vld [vmem:[#allocation2] sm:$0xff]
    %v354 = vld [vmem:[#allocation2 + $0x8] sm:$0xf]
    %v355 = vld [vmem:[#allocation2 + $0xc] sm:$0xff]
    %v356 = vld [vmem:[#allocation2 + $0x14] sm:$0xf]
    %v357 = vld [vmem:[#allocation2 + $0x18] sm:$0xff]
    %v358 = vld [vmem:[#allocation2 + $0x20] sm:$0xf]
    %v359 = vld [vmem:[#allocation2 + $0x24] sm:$0xff]
    %v360 = vld [vmem:[#allocation2 + $0x2c] sm:$0xf]
    %v361 = vld [vmem:[#allocation2 + $0x30] sm:$0xff]
    %v362 = vld [vmem:[#allocation2 + $0x38] sm:$0xf]
    %v363 = vld [vmem:[#allocation2 + $0x3c] sm:$0xff]
    %v364 = vld [vmem:[#allocation2 + $0x44] sm:$0xf]
    %v365 = vld [vmem:[#allocation2 + $0x48] sm:$0xff]
    %v366 = vld [vmem:[#allocation2 + $0x50] sm:$0xf]
    %v367 = vld [vmem:[#allocation2 + $0x54] sm:$0xff]
    %v368 = vld [vmem:[#allocation2 + $0x5c] sm:$0xf]
    %v369 = vld [vmem:[#allocation2 + $0x60] sm:$0xff]
    %v370 = vld [vmem:[#allocation2 + $0x68] sm:$0xf]
    %v371 = vld [vmem:[#allocation2 + $0x6c] sm:$0xff]
    %v372 = vld [vmem:[#allocation2 + $0x74] sm:$0xf]
    %v373 = vld [vmem:[#allocation2 + $0x78] sm:$0xff]
    %v374 = vld [vmem:[#allocation2 + $0x80] sm:$0xf]
    %v375 = vld [vmem:[#allocation2 + $0x84] sm:$0xff]
    %v376 = vld [vmem:[#allocation2 + $0x8c] sm:$0xf]
    %v377 = vld [vmem:[#allocation2 + $0x90] sm:$0xff]
    %v378 = vld [vmem:[#allocation2 + $0x98] sm:$0xf]
    %v379 = vld [vmem:[#allocation2 + $0x9c] sm:$0xff]
    %v380 = vld [vmem:[#allocation2 + $0xa4] sm:$0xf]
    %v381 = vld [vmem:[#allocation2 + $0xa8] sm:$0xff]
    %v382 = vld [vmem:[#allocation2 + $0xb0] sm:$0xf]
    %v383 = vld [vmem:[#allocation2 + $0xb4] sm:$0xff]
    %v384 = vld [vmem:[#allocation2 + $0xbc] sm:$0xf]
    %v385 = vld [vmem:[%s6] sm:$0x7]
    %v387 = vperm.slane %v385, 0
    %v388 = vperm.slane %v385, 1
    %v389 = vperm.slane %v385, 2
    %v425 = vunpack.c.l.b16 %v353
    %v426 = vunpack.c.h.b16 %v353
    %v427 = vunpack.c.l.b16 %v354
    %v428 = vunpack.c.l.b16 %v355
    %v429 = vunpack.c.h.b16 %v355
    %v430 = vunpack.c.l.b16 %v356
    %v431 = vunpack.c.l.b16 %v357
    %v432 = vunpack.c.h.b16 %v357
    %v433 = vunpack.c.l.b16 %v358
    %v434 = vunpack.c.l.b16 %v359
    %v435 = vunpack.c.h.b16 %v359
    %v436 = vunpack.c.l.b16 %v360
    %v437 = vunpack.c.l.b16 %v361
    %v438 = vunpack.c.h.b16 %v361
    %v439 = vunpack.c.l.b16 %v362
    %v440 = vunpack.c.l.b16 %v363
    %v441 = vunpack.c.h.b16 %v363
    %v442 = vunpack.c.l.b16 %v364
    %v443 = vunpack.c.l.b16 %v365
    %v444 = vunpack.c.h.b16 %v365
    %v445 = vunpack.c.l.b16 %v366
    %v446 = vunpack.c.l.b16 %v367
    %v447 = vunpack.c.h.b16 %v367
    %v448 = vunpack.c.l.b16 %v368
    %v449 = vunpack.c.l.b16 %v369
    %v450 = vunpack.c.h.b16 %v369
    %v451 = vunpack.c.l.b16 %v370
    %v452 = vunpack.c.l.b16 %v371
    %v453 = vunpack.c.h.b16 %v371
    %v454 = vunpack.c.l.b16 %v372
    %v455 = vunpack.c.l.b16 %v373
    %v456 = vunpack.c.h.b16 %v373
    %v457 = vunpack.c.l.b16 %v374
    %v458 = vunpack.c.l.b16 %v375
    %v459 = vunpack.c.h.b16 %v375
    %v460 = vunpack.c.l.b16 %v376
    %v461 = vunpack.c.l.b16 %v377
    %v462 = vunpack.c.h.b16 %v377
    %v463 = vunpack.c.l.b16 %v378
    %v464 = vunpack.c.l.b16 %v379
    %v465 = vunpack.c.h.b16 %v379
    %v466 = vunpack.c.l.b16 %v380
    %v467 = vunpack.c.l.b16 %v381
    %v468 = vunpack.c.h.b16 %v381
    %v469 = vunpack.c.l.b16 %v382
    %v470 = vunpack.c.l.b16 %v383
    %v471 = vunpack.c.h.b16 %v383
    %v472 = vunpack.c.l.b16 %v384
    %v473 = vpack.c.b16 %v428, %v425
    %v474 = vpack.c.b16 %v429, %v426
    %v475 = vpack.c.b16 %v430, %v427
    %v476 = vpack.c.b16 %v434, %v431
    %v477 = vpack.c.b16 %v435, %v432
    %v478 = vpack.c.b16 %v436, %v433
    %v479 = vpack.c.b16 %v440, %v437
    %v480 = vpack.c.b16 %v441, %v438
    %v481 = vpack.c.b16 %v442, %v439
    %v482 = vpack.c.b16 %v446, %v443
    %v483 = vpack.c.b16 %v447, %v444
    %v484 = vpack.c.b16 %v448, %v445
    %v485 = vpack.c.b16 %v452, %v449
    %v486 = vpack.c.b16 %v453, %v450
    %v487 = vpack.c.b16 %v454, %v451
    %v488 = vpack.c.b16 %v458, %v455
    %v489 = vpack.c.b16 %v459, %v456
    %v490 = vpack.c.b16 %v460, %v457
    %v491 = vpack.c.b16 %v464, %v461
    %v492 = vpack.c.b16 %v465, %v462
    %v493 = vpack.c.b16 %v466, %v463
    %v494 = vpack.c.b16 %v470, %v467
    %v495 = vpack.c.b16 %v471, %v468
    %v496 = vpack.c.b16 %v472, %v469
    %521 = vmatpush.bf16.msra.mxu0 %v494
    %522 = vmatpush.bf16.msra.mxu0 %v491
    %523 = vmatpush.bf16.msra.mxu0 %v488
    %524 = vmatpush.bf16.msra.mxu0 %v485
    %525 = vmatpush.bf16.msra.mxu0 %v482
    %526 = vmatpush.bf16.msra.mxu0 %v479
    %527 = vmatpush.bf16.msra.mxu0 %v476
    %528 = vmatpush.bf16.msra.mxu0 %v473
    %529 = vmatmul.bf16.gmra.mxu0 %v349
    %v530 = vpop.f32.mrf.mxu0
    %v531 = vadd.f32 %v387, %v530
    %v532 = vpop.f32.mrf.mxu0
    %v533 = vadd.f32 %v387, %v532
    %534 = vmatmul.bf16.gmra.mxu0 %v350
    %v535 = vpop.f32.mrf.mxu0
    %v536 = vadd.f32 %v387, %v535
    %v537 = vpop.f32.mrf.mxu0
    %v538 = vadd.f32 %v387, %v537
    %539 = vmatmul.bf16.gmra.mxu0 %v351
    %v540 = vpop.f32.mrf.mxu0
    %v541 = vadd.f32 %v387, %v540
    %v542 = vpop.f32.mrf.mxu0
    %v543 = vadd.f32 %v387, %v542
    %544 = vmatmul.bf16.gmra.mxu0 %v352
    %v545 = vpop.f32.mrf.mxu0
    %v546 = vadd.f32 %v387, %v545
    %v547 = vpop.f32.mrf.mxu0
    %v548 = vadd.f32 %v387, %v547
    %549 = vdwg.mxu0
    %550 = vmatpush.bf16.msra.mxu0 %v495
    %551 = vmatpush.bf16.msra.mxu0 %v492
    %552 = vmatpush.bf16.msra.mxu0 %v489
    %553 = vmatpush.bf16.msra.mxu0 %v486
    %554 = vmatpush.bf16.msra.mxu0 %v483
    %555 = vmatpush.bf16.msra.mxu0 %v480
    %556 = vmatpush.bf16.msra.mxu0 %v477
    %557 = vmatpush.bf16.msra.mxu0 %v474
    %558 = vmatmul.bf16.gmra.mxu0 %v349
    %v559 = vpop.f32.mrf.mxu0
    %v560 = vadd.f32 %v388, %v559
    %v561 = vpop.f32.mrf.mxu0
    %v562 = vadd.f32 %v388, %v561
    %563 = vmatmul.bf16.gmra.mxu0 %v350
    %v564 = vpop.f32.mrf.mxu0
    %v565 = vadd.f32 %v388, %v564
    %v566 = vpop.f32.mrf.mxu0
    %v567 = vadd.f32 %v388, %v566
    %568 = vmatmul.bf16.gmra.mxu0 %v351
    %v569 = vpop.f32.mrf.mxu0
    %v570 = vadd.f32 %v388, %v569
    %v571 = vpop.f32.mrf.mxu0
    %v572 = vadd.f32 %v388, %v571
    %573 = vmatmul.bf16.gmra.mxu0 %v352
    %v574 = vpop.f32.mrf.mxu0
    %v575 = vadd.f32 %v388, %v574
    %v576 = vpop.f32.mrf.mxu0
    %v577 = vadd.f32 %v388, %v576
    %578 = vdwg.mxu0
    %579 = vmatpush.bf16.msra.mxu0 %v496
    %580 = vmatpush.bf16.msra.mxu0 %v493
    %581 = vmatpush.bf16.msra.mxu0 %v490
    %582 = vmatpush.bf16.msra.mxu0 %v487
    %583 = vmatpush.bf16.msra.mxu0 %v484
    %584 = vmatpush.bf16.msra.mxu0 %v481
    %585 = vmatpush.bf16.msra.mxu0 %v478
    %586 = vmatpush.bf16.msra.mxu0 %v475
    %587 = vmatmul.bf16.gmra.mxu0 %v349
    %v588 = vpop.f32.mrf.mxu0
    %v589 = vadd.f32 %v389, %v588
    %v590 = vpop.f32.mrf.mxu0
    %v591 = vadd.f32 %v389, %v590
    %592 = vmatmul.bf16.gmra.mxu0 %v350
    %v593 = vpop.f32.mrf.mxu0
    %v594 = vadd.f32 %v389, %v593
    %v595 = vpop.f32.mrf.mxu0
    %v596 = vadd.f32 %v389, %v595
    %597 = vmatmul.bf16.gmra.mxu0 %v351
    %v598 = vpop.f32.mrf.mxu0
    %v599 = vadd.f32 %v389, %v598
    %v600 = vpop.f32.mrf.mxu0
    %v601 = vadd.f32 %v389, %v600
    %602 = vmatmul.bf16.gmra.mxu0 %v352
    %v603 = vpop.f32.mrf.mxu0
    %v604 = vadd.f32 %v389, %v603
    %v605 = vpop.f32.mrf.mxu0
    %v606 = vadd.f32 %v389, %v605
    %607 = vdwg.mxu0
    %v608 = vpack.c.bf16 %v560, %v531
    %v609 = vpack.c.bf16 %v589, %v589
    %v610 = vpack.c.bf16 %v562, %v533
    %v611 = vpack.c.bf16 %v591, %v591
    %v612 = vpack.c.bf16 %v565, %v536
    %v613 = vpack.c.bf16 %v594, %v594
    %v614 = vpack.c.bf16 %v567, %v538
    %v615 = vpack.c.bf16 %v596, %v596
    %v616 = vpack.c.bf16 %v570, %v541
    %v617 = vpack.c.bf16 %v599, %v599
    %v618 = vpack.c.bf16 %v572, %v543
    %v619 = vpack.c.bf16 %v601, %v601
    %v620 = vpack.c.bf16 %v575, %v546
    %v621 = vpack.c.bf16 %v604, %v604
    %v622 = vpack.c.bf16 %v577, %v548
    %v623 = vpack.c.bf16 %v606, %v606
    %624 = vst [vmem:[#allocation5] sm:$0xff] %v608
    %625 = vst [vmem:[#allocation5 + $0x8] sm:$0xf] %v609
    %626 = vst [vmem:[#allocation5 + $0xc] sm:$0xff] %v610
    %627 = vst [vmem:[#allocation5 + $0x14] sm:$0xf] %v611
    %628 = vst [vmem:[#allocation5 + $0x18] sm:$0xff] %v612
    %629 = vst [vmem:[#allocation5 + $0x20] sm:$0xf] %v613
    %630 = vst [vmem:[#allocation5 + $0x24] sm:$0xff] %v614
    %631 = vst [vmem:[#allocation5 + $0x2c] sm:$0xf] %v615
    %632 = vst [vmem:[#allocation5 + $0x30] sm:$0xff] %v616
    %633 = vst [vmem:[#allocation5 + $0x38] sm:$0xf] %v617
    %634 = vst [vmem:[#allocation5 + $0x3c] sm:$0xff] %v618
    %635 = vst [vmem:[#allocation5 + $0x44] sm:$0xf] %v619
    %636 = vst [vmem:[#allocation5 + $0x48] sm:$0xff] %v620
    %637 = vst [vmem:[#allocation5 + $0x50] sm:$0xf] %v621
    %638 = vst [vmem:[#allocation5 + $0x54] sm:$0xff] %v622
    %639 = vst [vmem:[#allocation5 + $0x5c] sm:$0xf] %v623
    // Predicated region
    $region34: #{tpu_custom_call.1} parent=1 // pred_check
      _
    $region35: #{tpu_custom_call.1} parent=1 // pred_check_branch
      %641 = sbr.rel (0) target = $region37
    $region36: #{tpu_custom_call.1} parent=1 // pred_region
      %643 = vsyncadd [#allocation4], 0
      %s644 = sshll.u32 [#allocation5], 4
      %s645 = int_to_ptr.vmem [resolvable:$true] %s644
      %s646 = sshll.u32 %s7, 4
      %s647 = int_to_ptr.hbm [resolvable:$true] %s646
      %652 = dma.vmem_to_hbm [thread:$0]  %s645, 1536, %s647, [#allocation4], 192, 192, 12
    $region37: #{tpu_custom_call.1} parent=1 // pred_fallthru
      _
    // Predicated region
    $region38: #{tpu_custom_call.1} parent=1 // pred_check
      _
    $region39: #{tpu_custom_call.1} parent=1 // pred_check_branch
      %654 = sbr.rel (0) target = $region41
    $region40: #{tpu_custom_call.1} parent=1 // pred_region
      %656 = dma.done [#allocation4], 1536
    $region41: #{tpu_custom_call.1} parent=1 // pred_fallthru
      _
    %657 = vsyncpa [#allocation3], 1
    %658 = vsyncpa [#allocation4], 1

</llo_original>
